<compile_context>
chip_gen: v5e
topology: v5e:2x2
jax: 0.10.0
libtpu: 0.0.40
codegen_flags: <defaults>
</compile_context>

<pallas_src>
import functools

import jax
import jax.numpy as jnp
from jax.experimental import pallas as pl
from jax.experimental.pallas import tpu as pltpu

# ----- module hyper-parameters (small, consistent with WN.__init__) -----
N_IN = 4        # n_in_channels
N_MEL = 8       # n_mel_channels
N_LAYERS = 4    # n_layers
N_CH = 32       # n_channels (must be even)
KSIZE = 3       # kernel_size (must be odd)
T = 16          # sequence length
B = 2           # batch

HALF = (KSIZE - 1) // 2
MAXPAD = (2 ** (N_LAYERS - 1)) * (KSIZE - 1) // 2   # largest "same" padding (=8)

# ----- packed data-slab layout (rows of the single bf16 "data" operand) -----
START_ROWS = 8            # rows fed to the start 1x1 conv: [audio(4) | mask(1) | 0(3)]
D_AUDIO0 = 0              # audio rows 0..3
D_MASK = 4                # mask row inside the start block (bias column of sw_aug)
D_CONST = 16              # constant fused-rhs block: spect(8) | mask(1) | zeros(23)
D_ROWS = 48               # total data-slab rows
RHS_K = 128               # fused contraction dim: 3*C + N_MEL + 1 = 105 padded to 128
BIAS_ROW = 3 * N_CH + N_MEL   # = 104, the mask/bias row inside the fused rhs


# --------------------------------- kernel ---------------------------------
def wn_kernel(data_ref, sw_ref, fw_ref, rw_ref, out_ref, rhs_ref, rsb_ref, *, nproll):
    """Grid-less WN forward over one lane-packed (channels, W) slab.

    data_ref : (D_ROWS, W) bf16  packed audio / mask / spect / zeros
    sw_ref   : (C, 8)      bf16  start 1x1 conv, bias folded at the mask column
    fw_ref   : (L, 2C,128) bf16  fused [3 dilated taps | cond | bias | 0] weights
    rw_ref   : (L, C+8, C+1) bf16 res/skip weights, end conv folded into the
                                  skip half, bias in the last column
    out_ref  : (2*N_IN, W) f32   folded skip accumulator == module output slab
    rhs_ref  : (128, W)    bf16  persistent fused-conv rhs scratch
    rsb_ref  : (C+1, W)    bf16  persistent res/skip rhs scratch ([acts | mask])
    """
    width = data_ref.shape[-1]

    start_blk = data_ref[0:START_ROWS, :]                 # (8, W) bf16
    mask_bf = start_blk[D_MASK:D_MASK + 1, :]             # (1, W) bf16, 1 valid / 0 pad
    mask = mask_bf.astype(jnp.float32)                    # (1, W) f32

    # Constant rows of the fused rhs (spect | mask-as-bias | zero pad to 128),
    # written once for all layers; and the constant mask row of the res/skip rhs.
    rhs_ref[3 * N_CH:, :] = data_ref[D_CONST:D_CONST + (RHS_K - 3 * N_CH), :]
    rsb_ref[N_CH:, :] = mask_bf

    # start 1x1 conv; bias rides the mask column -> pad columns stay exactly 0.
    audio = jnp.dot(sw_ref[...], start_blk,
                    preferred_element_type=jnp.float32)   # (C, W) f32

    skip = None
    for i in range(N_LAYERS):
        dilation = 2 ** i

        # --- fused dilated conv + cond conv + bias: ONE MXU matmul ---------
        # rhs row-block k holds audio[:, t + (k-HALF)*dilation]; the rolled
        # wrap-around lanes land only in zero-pad columns (exact "same" zero
        # padding).  Taps are built in bf16 (halves XLU roll + store traffic).
        a16 = audio.astype(jnp.bfloat16)
        for k in range(KSIZE):
            off = (k - HALF) * dilation
            # Single point of roll-convention adaptation (probed in wrapper).
            shift = ((-off) % width) if nproll else (off % width)
            rhs_ref[k * N_CH:(k + 1) * N_CH, :] = (
                a16 if off == 0 else pltpu.roll(a16, shift, axis=1))

        pre = jnp.dot(fw_ref[i], rhs_ref[...],
                      preferred_element_type=jnp.float32)             # (2C, W)

        # fused_add_tanh_sigmoid_multiply (f32: v5e-safe; bf16 gate is a
        # v6e/v7x-only micro-opt).  The mask multiply is REQUIRED: it keeps the
        # residual/skip updates exactly zero at pad columns.
        acts = jnp.tanh(pre[:N_CH]) * jax.nn.sigmoid(pre[N_CH:]) * mask   # (C, W)

        # --- res/skip 1x1 conv (end conv folded into the skip half) --------
        rsb_ref[:N_CH, :] = acts.astype(jnp.bfloat16)
        rw_i = rw_ref[i]                                               # (C+8, C+1)
        if i < N_LAYERS - 1:
            rs = jnp.dot(rw_i, rsb_ref[...],
                         preferred_element_type=jnp.float32)          # (C+8, W)
            audio = audio + rs[:N_CH]      # pad-clean: acts & bias masked
            sk = rs[N_CH:]
        else:
            # Last layer has no residual half in the PyTorch module: compute
            # only the folded skip rows (no dead matmul).
            sk = jnp.dot(rw_i[N_CH:, :], rsb_ref[...],
                         preferred_element_type=jnp.float32)          # (8, W)
        skip = sk if i == 0 else skip + sk

    out_ref[...] = skip                    # lane-dense (2*N_IN, W) f32 store


# ------------------------------ wrapper glue -------------------------------
@functools.cache
def _roll_is_nproll() -> bool:
    """True iff pltpu.roll(x, s, axis) moves data toward higher indices
    (np.roll convention).  Tiny one-time probe; the result is passed into the
    kernel so the convention adaptation lives in exactly one place."""
    def probe(x_ref, o_ref):
        o_ref[...] = pltpu.roll(x_ref[...], 1, axis=1)
    x = jax.lax.broadcasted_iota(jnp.float32, (8, 128), 1)
    y = pl.pallas_call(
        probe, out_shape=jax.ShapeDtypeStruct((8, 128), jnp.float32))(x)
    return bool(y[0, 1] == 0.0)


def _prepare_kernel_params(p):
    """Host-side algebra: fold taps+cond+bias into one fused weight per layer,
    fold the end 1x1 conv into the skip half of every res/skip weight, fold all
    biases into mask columns, pad the fused contraction to 128, cast to bf16."""
    sw, sb = p["sw"], p["sb"]
    iw, ib, cw, cb = p["iw"], p["ib"], p["cw"], p["cb"]
    rw_l, rb_l, ew, eb = p["rw"], p["rb"], p["ew"], p["eb"]

    # start: [sw | sb at the mask column | zeros]  -> (C, 8)
    sw_aug = jnp.zeros((N_CH, START_ROWS), jnp.float32)
    sw_aug = sw_aug.at[:, :N_IN].set(sw)
    sw_aug = sw_aug.at[:, D_MASK].set(sb)

    # fused in+cond: [iw tap0..tapK-1 | cw | ib+cb at BIAS_ROW | zeros] -> (L, 2C, 128)
    fw_aug = jnp.zeros((N_LAYERS, 2 * N_CH, RHS_K), jnp.float32)
    for k in range(KSIZE):
        fw_aug = fw_aug.at[:, :, k * N_CH:(k + 1) * N_CH].set(iw[:, k])
    fw_aug = fw_aug.at[:, :, 3 * N_CH:3 * N_CH + N_MEL].set(cw)
    fw_aug = fw_aug.at[:, :, BIAS_ROW].set(ib + cb)

    # res/skip with the end conv folded into the skip half, bias in last column.
    # Last layer: only the skip block is real (residual rows stay zero and are
    # never multiplied in the kernel).
    rw_aug = jnp.zeros((N_LAYERS, N_CH + 2 * N_IN, N_CH + 1), jnp.float32)
    for i in range(N_LAYERS):
        if i < N_LAYERS - 1:
            rw_aug = rw_aug.at[i, :N_CH, :N_CH].set(rw_l[i][:N_CH])
            rw_aug = rw_aug.at[i, :N_CH, N_CH].set(rb_l[i][:N_CH])
            sk_w, sk_b = rw_l[i][N_CH:], rb_l[i][N_CH:]
        else:
            sk_w, sk_b = rw_l[i], rb_l[i]
        sk_w = ew @ sk_w                       # (2*N_IN, C)
        sk_b = ew @ sk_b                       # (2*N_IN,)
        if i == 0:
            sk_b = sk_b + eb                   # end bias folded exactly once
        rw_aug = rw_aug.at[i, N_CH:, :N_CH].set(sk_w)
        rw_aug = rw_aug.at[i, N_CH:, N_CH].set(sk_b)

    bf = jnp.bfloat16
    return sw_aug.astype(bf), fw_aug.astype(bf), rw_aug.astype(bf)


def _pack(x, width):
    """(B, C, T) -> (C, width): batch slots separated by ONE shared MAXPAD-wide
    zero gap (edges keep MAXPAD), zero-filled to the lane-dense width."""
    b, c, t = x.shape
    xp = jnp.pad(x, ((0, 0), (0, 0), (0, MAXPAD)))            # (B, C, T+MAXPAD)
    slab = jnp.transpose(xp, (1, 0, 2)).reshape(c, b * (t + MAXPAD))
    return jnp.pad(slab, ((0, 0), (MAXPAD, width - MAXPAD - b * (t + MAXPAD))))


def wn_forward(audio, spect, params):
    b, _, t = audio.shape
    used = MAXPAD + b * (t + MAXPAD)
    width = max(128, pl.cdiv(used, 128) * 128)                # lane-dense

    mask_slab = _pack(jnp.ones((b, 1, t), jnp.float32), width)          # (1, W)
    data = jnp.zeros((D_ROWS, width), jnp.float32)
    data = data.at[D_AUDIO0:D_AUDIO0 + N_IN].set(_pack(audio, width))   # audio
    data = data.at[D_MASK].set(mask_slab[0])                            # mask (start bias)
    data = data.at[D_CONST:D_CONST + N_MEL].set(_pack(spect, width))    # spect
    data = data.at[D_CONST + N_MEL].set(mask_slab[0])                   # mask (fused bias)
    data = data.astype(jnp.bfloat16)

    sw_aug, fw_aug, rw_aug = _prepare_kernel_params(params)

    kernel = functools.partial(wn_kernel, nproll=_roll_is_nproll())
    # Tiny problem -> single grid-less invocation; every operand is a
    # whole-array VMEM block (default BlockSpecs).  Total VMEM < 200 KiB.
    out_slab = pl.pallas_call(
        kernel,
        out_shape=jax.ShapeDtypeStruct((2 * N_IN, width), jnp.float32),
        scratch_shapes=[pltpu.VMEM((RHS_K, width), jnp.bfloat16),
                        pltpu.VMEM((N_CH + 1, width), jnp.bfloat16)],
    )(data, sw_aug, fw_aug, rw_aug)

    out = out_slab[:, MAXPAD:MAXPAD + b * (t + MAXPAD)]
    out = out.reshape(2 * N_IN, b, t + MAXPAD)[:, :, :t]
    return jnp.transpose(out, (1, 0, 2))                      # (B, 2*N_IN, T)


# ----------------- deterministic parameter construction ------------------
def init_params(key):
    ks = iter(jax.random.split(key, 64))

    def rand(shape, scale=0.1):
        return scale * jax.random.normal(next(ks), shape, jnp.float32)

    def wnorm(v, g):
        # torch.nn.utils.weight_norm: w = g * v / ||v|| (norm over non-out dims)
        n = jnp.sqrt(jnp.sum(v * v, axis=tuple(range(1, v.ndim)), keepdims=True))
        return g.reshape((-1,) + (1,) * (v.ndim - 1)) * v / n

    # start: Conv1d(N_IN, N_CH, 1) with weight norm
    sv = rand((N_CH, N_IN, 1)); sg = 1.0 + rand((N_CH,))
    sw = wnorm(sv, sg)[..., 0]
    sb = rand((N_CH,))

    iw_l, ib_l, cw_l, cb_l, rw_l, rb_l = [], [], [], [], [], []
    for i in range(N_LAYERS):
        iv = rand((2 * N_CH, N_CH, KSIZE)); ig = 1.0 + rand((2 * N_CH,))
        iw_l.append(jnp.transpose(wnorm(iv, ig), (2, 0, 1)))   # (K, 2C, C)
        ib_l.append(rand((2 * N_CH,)))

        cv = rand((2 * N_CH, N_MEL, 1)); cg = 1.0 + rand((2 * N_CH,))
        cw_l.append(wnorm(cv, cg)[..., 0])                     # (2C, N_MEL)
        cb_l.append(rand((2 * N_CH,)))

        # Natural row count: 2C for i < L-1, C (all skip) for the last layer.
        res_out = 2 * N_CH if i < N_LAYERS - 1 else N_CH
        rv = rand((res_out, N_CH, 1)); rg = 1.0 + rand((res_out,))
        rw_l.append(wnorm(rv, rg)[..., 0])
        rb_l.append(rand((res_out,)))

    # end: Conv1d(N_CH, 2*N_IN, 1).  NOTE: the PyTorch module zero-initializes
    # this conv; random values here only make the numerical check exercise the
    # whole layer stack (forward semantics unchanged).
    ew = rand((2 * N_IN, N_CH))
    eb = rand((2 * N_IN,))

    return dict(sw=sw, sb=sb,
                iw=jnp.stack(iw_l), ib=jnp.stack(ib_l),
                cw=jnp.stack(cw_l), cb=jnp.stack(cb_l),
                rw=rw_l, rb=rb_l, ew=ew, eb=eb)


# ----------------------- pure-JAX reference (for checking) ---------------
def wn_ref(audio, spect, p, matmul_dtype=jnp.float32):
    """Faithful PyTorch-WN forward.  matmul_dtype=bfloat16 mirrors the kernel's
    MXU operand precision (f32 accumulation); f32 gives the true-module values."""
    t = audio.shape[2]

    def mm(w, x):
        return jnp.einsum('oi,bit->bot', w.astype(matmul_dtype),
                          x.astype(matmul_dtype),
                          preferred_element_type=jnp.float32)

    x = mm(p["sw"], audio) + p["sb"][None, :, None]
    skip = None
    for i in range(N_LAYERS):
        d = 2 ** i
        pad = d * HALF
        xp = jnp.pad(x, ((0, 0), (0, 0), (pad, pad)))
        pre = mm(p["cw"][i], spect) + p["cb"][i][None, :, None] + p["ib"][i][None, :, None]
        for k in range(KSIZE):
            pre = pre + mm(p["iw"][i, k], xp[:, :, k * d:k * d + t])
        acts = jnp.tanh(pre[:, :N_CH]) * jax.nn.sigmoid(pre[:, N_CH:])
        rs = mm(p["rw"][i], acts) + p["rb"][i][None, :, None]
        if i < N_LAYERS - 1:
            x = x + rs[:, :N_CH]
            s = rs[:, N_CH:]
        else:
            s = rs
        skip = s if i == 0 else skip + s
    return mm(p["ew"], skip) + p["eb"][None, :, None]


if __name__ == "__main__":
    key = jax.random.PRNGKey(0)
    k1, k2, k3 = jax.random.split(key, 3)
    audio = jax.random.normal(k1, (B, N_IN, T), jnp.float32)
    spect = jax.random.normal(k2, (B, N_MEL, T), jnp.float32)
    params = init_params(k3)

    out = wn_forward(audio, spect, params)
    jax.block_until_ready(out)
    assert out.shape == (B, 2 * N_IN, T)

    # Tight structural check vs a reference using the kernel's bf16-operand /
    # f32-accumulate matmul policy, plus an absolute drift bound vs true f32.
    ref_bf16 = wn_ref(audio, spect, params, matmul_dtype=jnp.bfloat16)
    ref_f32 = wn_ref(audio, spect, params, matmul_dtype=jnp.float32)
    err_bf = float(jnp.max(jnp.abs(out - ref_bf16)))
    err_f32 = float(jnp.max(jnp.abs(out - ref_f32)))
    assert jnp.allclose(out, ref_bf16, atol=2e-2, rtol=2e-2), err_bf
    assert jnp.allclose(out, ref_f32, atol=5e-2, rtol=5e-2), err_f32
    print("KERNEL_OK")
</pallas_src>

<mosaic_0001>
module attributes {stable_mosaic.version = 11 : i64} {
  func.func @probe(%arg0: memref<8x128xf32, #tpu.memory_space<vmem>>, %arg1: memref<8x128xf32, #tpu.memory_space<vmem>>) attributes {dimension_semantics = [], scalar_prefetch = 0 : i64, scratch_operands = 0 : i64, tpu.core_type = #tpu.core_type<tc>} {
    %c0 = arith.constant 0 : index
    %c0_0 = arith.constant 0 : index
    %0 = vector.load %arg0[%c0, %c0_0] : memref<8x128xf32, #tpu.memory_space<vmem>>, vector<8x128xf32>
    %c1_i32 = arith.constant 1 : i32
    %1 = tpu.dynamic_rotate %0 by %c1_i32 dim 1 : vector<8x128xf32>, i32 -> vector<8x128xf32>
    %c0_1 = arith.constant 0 : index
    %c0_2 = arith.constant 0 : index
    %2 = vector.load %arg1[%c0_1, %c0_2] : memref<8x128xf32, #tpu.memory_space<vmem>>, vector<8x128xf32>
    tpu.vector_store %arg1[%c0_1, %c0_2], %1 {strides = array<i32>} : memref<8x128xf32, #tpu.memory_space<vmem>>, vector<8x128xf32>,
    return
  }
}

</mosaic_0001>

<llo_original>
// kernel: tpu_custom_call.1
$region0: #{tpu_custom_call.1}
  #allocation0 [shape = 'u32[]', space=smem, size = 0x4, offset = 0x4, fixed_abs, tag = 'smem constant byte address 0x4 - core index']
  #allocation1 [shape = 'u32[72,128]{1,0:T(1,128)}', space=vmem, size = 0x9000, scoped, tag = 'internal scratch']
  %s0 = inlined_call_operand.hbm [shape: f32[8,128], index: 0, kind: input, shape index: {}]
  %s1 = inlined_call_operand.hbm [shape: f32[8,128], index: 1, kind: output, shape index: {}]
  %s2 = sld [smem:[#allocation0]]
  $region18: #{tpu_custom_call.1} parent=0
    _
  %s4 = ssub.s32 1, %s2
  %s5 = scalar_select 0, %s4, %s2
  $region1: #{tpu_custom_call.1} parent=0
    #allocation2 [shape = 'u8[4096]{0}', space=vmem, size = 0x1000, scoped, tag = 'input window, operand 0, single buffered']
    #allocation3 [shape = 's32[1]{0}', space=sflag, size = 0x4, scoped, tag = 'scoped memory for tpu_custom_call.1']
    #allocation4 [shape = 's32[1]{0}', space=sflag, size = 0x4, scoped, tag = 'scoped memory for tpu_custom_call.1']
    #allocation5 [shape = 'u8[4096]{0}', space=vmem, size = 0x1000, scoped, tag = 'output window, operand 0, single buffered']
    %6 = vsyncpa [#allocation3], 0
    %7 = vsyncpa [#allocation4], 0
    // Predicated region
    $region2: #{tpu_custom_call.1} parent=1 // pred_check
      _
    $region3: #{tpu_custom_call.1} parent=1 // pred_check_branch
      %9 = sbr.rel (0) target = $region5
    $region4: #{tpu_custom_call.1} parent=1 // pred_region
      %11 = vsyncadd [#allocation3], 0
      %s13 = sshll.u32 %s0, 4
      %s14 = int_to_ptr.hbm [resolvable:$true] %s13
      %s15 = sshll.u32 [#allocation2], 4
      %s16 = int_to_ptr.vmem [resolvable:$true] %s15
      %18 = dma.hbm_to_vmem [thread:$0]  %s14, 128, %s16, [#allocation3]
    $region5: #{tpu_custom_call.1} parent=1 // pred_fallthru
      _
    // Predicated region
    $region6: #{tpu_custom_call.1} parent=1 // pred_check
      _
    $region7: #{tpu_custom_call.1} parent=1 // pred_check_branch
      %20 = sbr.rel (0) target = $region9
    $region8: #{tpu_custom_call.1} parent=1 // pred_region
      %22 = dma.done [#allocation3], 128
    $region9: #{tpu_custom_call.1} parent=1 // pred_fallthru
      _
    %v23 = vld [vmem:[#allocation2] sm:$0xff]
    %24 = vrot.lane.b32.xlu0 %v23, 1
    %v25 = vpop.permute.xlu0 %24
    %26 = vst [vmem:[#allocation5] sm:$0xff] %v25
    // Predicated region
    $region10: #{tpu_custom_call.1} parent=1 // pred_check
      _
    $region11: #{tpu_custom_call.1} parent=1 // pred_check_branch
      %28 = sbr.rel (0) target = $region13
    $region12: #{tpu_custom_call.1} parent=1 // pred_region
      %30 = vsyncadd [#allocation4], 0
      %s32 = sshll.u32 [#allocation5], 4
      %s33 = int_to_ptr.vmem [resolvable:$true] %s32
      %s34 = sshll.u32 %s1, 4
      %s35 = int_to_ptr.hbm [resolvable:$true] %s34
      %37 = dma.vmem_to_hbm [thread:$0]  %s33, 128, %s35, [#allocation4]
    $region13: #{tpu_custom_call.1} parent=1 // pred_fallthru
      _
    // Predicated region
    $region14: #{tpu_custom_call.1} parent=1 // pred_check
      _
    $region15: #{tpu_custom_call.1} parent=1 // pred_check_branch
      %39 = sbr.rel (0) target = $region17
    $region16: #{tpu_custom_call.1} parent=1 // pred_region
      %41 = dma.done [#allocation4], 128
    $region17: #{tpu_custom_call.1} parent=1 // pred_fallthru
      _
    %42 = vsyncpa [#allocation3], 1
    %43 = vsyncpa [#allocation4], 1

</llo_original>
